<compile_context>
chip_gen: v6e
topology: v6e:2x2x1
jax: 0.10.0
libtpu: 0.0.40
codegen_flags: <defaults>
</compile_context>

<pallas_src>
import functools

import numpy as np
import jax
import jax.numpy as jnp
from jax.experimental import pallas as pl
from jax.experimental.pallas import tpu as pltpu


# ---------------------------------------------------------------------------
# One-time capability probes / hardware queries (tiny, cached).
# ---------------------------------------------------------------------------
@functools.lru_cache(maxsize=None)
def _bitcast_complex_ok() -> bool:
    """True if complex64 <-> interleaved float32 bitcasts work on this backend."""
    try:
        a = jnp.array([1.0 + 2.0j, -3.0 + 0.5j], jnp.complex64)
        f = jax.lax.bitcast_convert_type(a, jnp.float32)          # (2, 2)
        b = jax.lax.bitcast_convert_type(f, jnp.complex64)        # (2,)
        ok = (f.shape == (2, 2)
              and np.allclose(np.asarray(f), np.array([[1.0, 2.0], [-3.0, 0.5]]))
              and np.allclose(np.asarray(b), np.asarray(a)))
        return bool(ok)
    except Exception:
        return False


@functools.lru_cache(maxsize=None)
def _roll_matches_jnp() -> bool:
    """True if pltpu.roll(x, s, axis)[..., i] == x[..., i - s] (jnp.roll convention)."""
    def probe(x_ref, o_ref):
        o_ref[...] = pltpu.roll(x_ref[...], 1, axis=1)

    x = jax.lax.broadcasted_iota(jnp.int32, (8, 128), 1)
    out = pl.pallas_call(probe, out_shape=jax.ShapeDtypeStruct((8, 128), jnp.int32))(x)
    return int(out[0, 0]) == 127


@functools.lru_cache(maxsize=None)
def _vmem_capacity_bytes() -> int:
    try:
        return int(pltpu.get_tpu_info().vmem_capacity_bytes)
    except Exception:
        return 64 << 20            # conservative (v7x per-TC physical VMEM)


def _vmem_limit(need: int, cap: int) -> int:
    """Explicit scoped-VMEM limit: generous headroom over our estimate, capped."""
    return int(min(3 * cap // 4, max(need + need // 2, 24 << 20)))


# ---------------------------------------------------------------------------
# Fused kernel: pool + conv + ratio-mask + broadcast multiply on one resident row.
# ---------------------------------------------------------------------------
def _fused_kernel(wre_ref, wim_ref, x_ref, o_ref, ypr_ref, ypi_ref, *,
                  k, pad, inv_hw, s_prev, s_next):
    # x_ref block: (1, C, L) interleaved [re, im, re, im, ...] float32.
    # wre_ref / wim_ref: (k,) float32 conv weights in SMEM.
    # ypr_ref / ypi_ref: (C + 2*pad, 1) float32 scratch (zero-padded channel axis).
    x = x_ref[0]                                               # (C, L)
    C = x.shape[0]
    lane = jax.lax.broadcasted_iota(jnp.int32, x.shape, 1)     # built once, reused
    is_re = (lane & 1) == 0

    # ---- complex global average pool (per channel) ----
    s_re = jnp.sum(jnp.where(is_re, x, 0.0), axis=1, keepdims=True)   # (C, 1)
    s_im = jnp.sum(jnp.where(is_re, 0.0, x), axis=1, keepdims=True)   # (C, 1)

    # Stage pooled means into a zero-padded channel buffer (Conv1d zero padding).
    ypr_ref[...] = jnp.zeros_like(ypr_ref)
    ypi_ref[...] = jnp.zeros_like(ypi_ref)
    ypr_ref[pl.ds(pad, C), :] = s_re * inv_hw
    ypi_ref[pl.ds(pad, C), :] = s_im * inv_hw

    # ---- complex Conv1d over channels (cross-correlation, no bias), k tiny/static ----
    acc_re = jnp.zeros((C, 1), jnp.float32)
    acc_im = jnp.zeros((C, 1), jnp.float32)
    for j in range(k):
        yr = ypr_ref[pl.ds(j, C), :]                           # y_padded[c + j]
        yi = ypi_ref[pl.ds(j, C), :]
        wr = wre_ref[j]
        wi = wim_ref[j]
        acc_re = acc_re + wr * yr - wi * yi
        acc_im = acc_im + wr * yi + wi * yr

    # ---- ComplexRatioMask: m = y / (1 + |y|) (exact; tiny EUP/VPU work) ----
    mag = jnp.sqrt(acc_re * acc_re + acc_im * acc_im)
    scale = 1.0 / (1.0 + mag)
    m_re = acc_re * scale                                      # (C, 1)
    m_im = acc_im * scale

    # ---- broadcast complex multiply directly on interleaved lanes ----
    #   out[2i]   = re_i*m_re - im_i*m_im ; out[2i+1] = im_i*m_re + re_i*m_im
    x_next = pltpu.roll(x, s_next, axis=1)                     # x[..., j+1]
    x_prev = pltpu.roll(x, s_prev, axis=1)                     # x[..., j-1]
    partner = jnp.where(is_re, x_next, x_prev)                 # pair-swapped lanes
    coef = jnp.where(is_re, -m_im, m_im)
    o_ref[0] = x * m_re + partner * coef


# ---------------------------------------------------------------------------
# Two-pass fallback kernels (row-collapsed layout, full-L lane blocks).
# ---------------------------------------------------------------------------
def _pool_rows_kernel(x_ref, s_ref):
    # x_ref block: (Rt, L) interleaved float32; s_ref: (Rt, 2) [sum_re, sum_im].
    x = x_ref[...]
    lane = jax.lax.broadcasted_iota(jnp.int32, x.shape, 1)
    is_re = (lane & 1) == 0
    s_re = jnp.sum(jnp.where(is_re, x, 0.0), axis=1, keepdims=True)
    s_im = jnp.sum(jnp.where(is_re, 0.0, x), axis=1, keepdims=True)
    s_ref[:, 0:1] = s_re
    s_ref[:, 1:2] = s_im


def _apply_rows_kernel(m_ref, x_ref, o_ref, *, s_prev, s_next):
    # m_ref: (Rt, 2) [m_re, m_im]; x_ref/o_ref: (Rt, L) interleaved float32.
    x = x_ref[...]
    m = m_ref[...]
    m_re = m[:, 0:1]
    m_im = m[:, 1:2]
    lane = jax.lax.broadcasted_iota(jnp.int32, x.shape, 1)
    is_re = (lane & 1) == 0
    x_next = pltpu.roll(x, s_next, axis=1)
    x_prev = pltpu.roll(x, s_prev, axis=1)
    partner = jnp.where(is_re, x_next, x_prev)
    coef = jnp.where(is_re, -m_im, m_im)
    o_ref[...] = x * m_re + partner * coef


# ---------------------------------------------------------------------------
# Tiny plain-JAX glue used by the two-pass fallback: channel Conv1d
# (cross-correlation, zero pad, no bias) followed by the complex ratio mask.
# ---------------------------------------------------------------------------
def _conv_ratio_mask(y, w):
    B, C = y.shape
    k = int(w.shape[-1])
    pad = (k - 1) // 2
    yp = jnp.pad(y, ((0, 0), (pad, pad)))
    conv = jnp.zeros((B, C), y.dtype)
    for j in range(k):
        conv = conv + w[0, 0, j] * yp[:, j:j + C]
    return conv / (1.0 + jnp.abs(conv))                        # ComplexRatioMask


# ---------------------------------------------------------------------------
# Path implementations.
# ---------------------------------------------------------------------------
def _cv_eca_fused(xf, w, *, B, C, L, HW, k, pad, s_prev, s_next, cap):
    w_re = jnp.real(w).reshape(-1).astype(jnp.float32)         # (k,)
    w_im = jnp.imag(w).reshape(-1).astype(jnp.float32)         # (k,)
    kern = functools.partial(_fused_kernel, k=k, pad=pad, inv_hw=float(1.0 / HW),
                             s_prev=s_prev, s_next=s_next)
    slab = C * L * 4
    need = 8 * slab + (2 << 20)                                # blocks + temporaries
    return pl.pallas_call(
        kern,
        grid=(B,),
        in_specs=[pl.BlockSpec(memory_space=pltpu.MemorySpace.SMEM),   # w_re
                  pl.BlockSpec(memory_space=pltpu.MemorySpace.SMEM),   # w_im
                  pl.BlockSpec((1, C, L), lambda b: (b, 0, 0))],       # x (full row)
        out_specs=pl.BlockSpec((1, C, L), lambda b: (b, 0, 0)),
        out_shape=jax.ShapeDtypeStruct((B, C, L), jnp.float32),
        scratch_shapes=[pltpu.VMEM((C + 2 * pad, 1), jnp.float32),
                        pltpu.VMEM((C + 2 * pad, 1), jnp.float32)],
        compiler_params=pltpu.CompilerParams(
            dimension_semantics=("parallel",),
            vmem_limit_bytes=_vmem_limit(need, cap)),
        cost_estimate=pl.CostEstimate(
            flops=9 * B * C * L, transcendentals=2 * B * C,
            bytes_accessed=8 * B * C * L),
    )(w_re, w_im, xf)


def _pick_row_tile(R, L, block_budget_bytes):
    """Largest multiple-of-8 divisor of R with ~8 slabs of (Rt, L) f32 <= budget."""
    max_rt = max(1, block_budget_bytes // (8 * L * 4))
    best = None
    rt = 8
    while rt <= min(R, max_rt):
        if R % rt == 0:
            best = rt
        rt += 8
    if best is not None:
        return best
    # TODO(synk): rows not tileable in multiples of 8, or a single 8-row block
    # exceeds the budget (extremely large spatial size) — fall back to one block.
    return R


def _cv_eca_two_pass(xf, w, *, B, C, L, HW, s_prev, s_next, cap):
    R = B * C
    xr = xf.reshape(R, L)
    block_budget = min(8 << 20, max(cap // 8, 2 << 20))
    Rt = _pick_row_tile(R, L, block_budget)
    n_r = R // Rt
    need = 8 * Rt * L * 4 + (1 << 20)
    cparams = pltpu.CompilerParams(dimension_semantics=("parallel",),
                                   vmem_limit_bytes=_vmem_limit(need, cap))

    # Pass 1: complex global sum per row (channel).  Merged (R, 2) output.
    sums = pl.pallas_call(
        _pool_rows_kernel,
        grid=(n_r,),
        in_specs=[pl.BlockSpec((Rt, L), lambda r: (r, 0))],
        out_specs=pl.BlockSpec((Rt, 2), lambda r: (r, 0)),
        out_shape=jax.ShapeDtypeStruct((R, 2), jnp.float32),
        compiler_params=cparams,
    )(xr)

    # Tiny O(B*C*k) glue: mean, channel conv, ratio mask.
    y = (sums[:, 0] + 1j * sums[:, 1]).reshape(B, C) / HW      # complex64 mean
    mask = _conv_ratio_mask(y, w)                              # (B, C) complex64
    m2 = jnp.stack([jnp.real(mask), jnp.imag(mask)],
                   axis=-1).reshape(R, 2).astype(jnp.float32)  # (R, 2)

    # Pass 2: broadcast complex multiply on interleaved lanes.
    out = pl.pallas_call(
        functools.partial(_apply_rows_kernel, s_prev=s_prev, s_next=s_next),
        grid=(n_r,),
        in_specs=[pl.BlockSpec((Rt, 2), lambda r: (r, 0)),     # mask
                  pl.BlockSpec((Rt, L), lambda r: (r, 0))],    # x interleaved
        out_specs=pl.BlockSpec((Rt, L), lambda r: (r, 0)),
        out_shape=jax.ShapeDtypeStruct((R, L), jnp.float32),
        compiler_params=cparams,
    )(m2, xr)
    return out.reshape(B, C, L)


# ---------------------------------------------------------------------------
# Wrapper.
# ---------------------------------------------------------------------------
def cv_eca(x, w, *, force_two_pass=False):
    """x: (B, C, H, W) complex64, w: (1, 1, k) complex64 Conv1d weight."""
    B, C, H, W = x.shape
    HW = H * W
    L = 2 * HW                                                 # interleaved f32 lanes/row
    assert L % 2 == 0                                          # parity-trick invariant
    k = int(w.shape[-1])
    pad = (k - 1) // 2

    use_bitcast = _bitcast_complex_ok()
    if use_bitcast:
        # Zero-copy reinterpretation: (B, C, H, W) c64 -> (B, C, 2*HW) f32.
        xf = jax.lax.bitcast_convert_type(x, jnp.float32).reshape(B, C, L)
    else:
        # TODO(synk): backend without complex bitcast — costs one extra HBM pass each way.
        xf = jnp.stack([jnp.real(x), jnp.imag(x)], axis=-1).reshape(B, C, L).astype(jnp.float32)

    # pltpu.roll direction (probed once, cached): x_prev[j]=x[j-1], x_next[j]=x[j+1].
    if _roll_matches_jnp():
        s_prev, s_next = 1, L - 1
    else:
        s_prev, s_next = L - 1, 1

    cap = _vmem_capacity_bytes()
    fused_need = 8 * C * L * 4 + (2 << 20)                     # blocks + temporaries
    if (not force_two_pass) and fused_need <= cap // 2:
        of = _cv_eca_fused(xf, w, B=B, C=C, L=L, HW=HW, k=k, pad=pad,
                           s_prev=s_prev, s_next=s_next, cap=cap)
    else:
        of = _cv_eca_two_pass(xf, w, B=B, C=C, L=L, HW=HW,
                              s_prev=s_prev, s_next=s_next, cap=cap)

    of = of.reshape(B, C, H, W, 2)
    if use_bitcast:
        return jax.lax.bitcast_convert_type(of, jnp.complex64)
    return jax.lax.complex(of[..., 0], of[..., 1]).astype(jnp.complex64)


# ---------------------------------------------------------------------------
# Reference + test harness.
# ---------------------------------------------------------------------------
def cv_eca_reference(x, w):
    """Plain-JAX reference matching the PyTorch forward."""
    B, C, H, W = x.shape
    k = int(w.shape[-1])
    pad = (k - 1) // 2
    y = jnp.mean(x, axis=(2, 3))                               # (B, C) complex
    yp = jnp.pad(y, ((0, 0), (pad, pad)))
    conv = jnp.zeros((B, C), x.dtype)
    for j in range(k):
        conv = conv + w[0, 0, j] * yp[:, j:j + C]
    mask = conv / (1.0 + jnp.abs(conv))
    return x * mask[:, :, None, None]


def eca_kernel_size(channels, b=1, gamma=2):
    kk = int(abs(np.log2(channels) / gamma + b / gamma))
    return kk if kk % 2 else kk + 1


if __name__ == "__main__":
    for (B, C, H, W) in [(2, 8, 16, 16), (2, 4, 8, 8)]:
        k = eca_kernel_size(C)                 # 3 for C=8 (pad=1), 1 for C=4 (pad=0)
        key = jax.random.PRNGKey(0)
        k1, k2, k3, k4 = jax.random.split(key, 4)
        x = (jax.random.normal(k1, (B, C, H, W), jnp.float32)
             + 1j * jax.random.normal(k2, (B, C, H, W), jnp.float32)).astype(jnp.complex64)
        # Deterministic complex Conv1d(1, 1, k, bias=False) weight of shape (1, 1, k).
        w = (0.5 * (jax.random.normal(k3, (1, 1, k), jnp.float32)
                    + 1j * jax.random.normal(k4, (1, 1, k), jnp.float32))).astype(jnp.complex64)

        ref = cv_eca_reference(x, w)

        # Primary fused (read-once/write-once) path.
        out_fused = jax.block_until_ready(cv_eca(x, w))
        np.testing.assert_allclose(np.asarray(out_fused), np.asarray(ref),
                                   rtol=1e-5, atol=1e-5)

        # Two-pass fallback path (used for rows too large for VMEM) — exercised
        # explicitly here so both code paths are validated on-device.
        out_tp = jax.block_until_ready(cv_eca(x, w, force_two_pass=True))
        np.testing.assert_allclose(np.asarray(out_tp), np.asarray(ref),
                                   rtol=1e-5, atol=1e-5)
    print("KERNEL_OK")
</pallas_src>

<mosaic_0001>
module attributes {stable_mosaic.version = 11 : i64} {
  func.func @probe(%arg0: memref<8x128xi32, #tpu.memory_space<vmem>>, %arg1: memref<8x128xi32, #tpu.memory_space<vmem>>) attributes {dimension_semantics = [], scalar_prefetch = 0 : i64, scratch_operands = 0 : i64, tpu.core_type = #tpu.core_type<tc>} {
    %c0 = arith.constant 0 : index
    %c0_0 = arith.constant 0 : index
    %0 = vector.load %arg0[%c0, %c0_0] : memref<8x128xi32, #tpu.memory_space<vmem>>, vector<8x128xi32>
    %c1_i32 = arith.constant 1 : i32
    %1 = tpu.dynamic_rotate %0 by %c1_i32 dim 1 : vector<8x128xi32>, i32 -> vector<8x128xi32>
    %c0_1 = arith.constant 0 : index
    %c0_2 = arith.constant 0 : index
    %2 = vector.load %arg1[%c0_1, %c0_2] : memref<8x128xi32, #tpu.memory_space<vmem>>, vector<8x128xi32>
    tpu.vector_store %arg1[%c0_1, %c0_2], %1 {strides = array<i32>} : memref<8x128xi32, #tpu.memory_space<vmem>>, vector<8x128xi32>,
    return
  }
}

</mosaic_0001>

<llo_original>
// kernel: tpu_custom_call.1
$region0: #{tpu_custom_call.1}
  #allocation0 [shape = 'u32[]', space=smem, size = 0x4, offset = 0x4, fixed_abs, tag = 'smem constant byte address 0x4 - core index']
  #allocation1 [shape = 'u32[144,128]{1,0:T(1,128)}', space=vmem, size = 0x12000, scoped, tag = 'internal scratch']
  %s0 = inlined_call_operand.hbm [shape: s32[8,128], index: 0, kind: input, shape index: {}]
  %s1 = inlined_call_operand.hbm [shape: s32[8,128], index: 1, kind: output, shape index: {}]
  %s2 = sld [smem:[#allocation0]]
  $region18: #{tpu_custom_call.1} parent=0
    _
  %s4 = ssub.s32 1, %s2
  %s5 = scalar_select 0, %s4, %s2
  $region1: #{tpu_custom_call.1} parent=0
    #allocation2 [shape = 'u8[4096]{0}', space=vmem, size = 0x1000, scoped, tag = 'input window, operand 0, single buffered']
    #allocation3 [shape = 's32[1]{0}', space=sflag, size = 0x4, scoped, tag = 'scoped memory for tpu_custom_call.1']
    #allocation4 [shape = 's32[1]{0}', space=sflag, size = 0x4, scoped, tag = 'scoped memory for tpu_custom_call.1']
    #allocation5 [shape = 'u8[4096]{0}', space=vmem, size = 0x1000, scoped, tag = 'output window, operand 0, single buffered']
    %6 = vsyncpa [#allocation3], 0
    %7 = vsyncpa [#allocation4], 0
    // Predicated region
    $region2: #{tpu_custom_call.1} parent=1 // pred_check
      _
    $region3: #{tpu_custom_call.1} parent=1 // pred_check_branch
      %9 = sbr.rel (0) target = $region5
    $region4: #{tpu_custom_call.1} parent=1 // pred_region
      %s11 = ssub.s32 128, 128
      %12 = vsyncadd [#allocation3], %s11
      %s14 = sshll.u32 [#allocation2], 4
      %s15 = int_to_ptr.vmem [resolvable:$true] %s14
      %17 = dma.hbm_to_vmem [thread:$0]  %s0, 128, %s15, [#allocation3]
    $region5: #{tpu_custom_call.1} parent=1 // pred_fallthru
      _
    // Predicated region
    $region6: #{tpu_custom_call.1} parent=1 // pred_check
      _
    $region7: #{tpu_custom_call.1} parent=1 // pred_check_branch
      %19 = sbr.rel (0) target = $region9
    $region8: #{tpu_custom_call.1} parent=1 // pred_region
      %20 = dma.done [#allocation3], 128
    $region9: #{tpu_custom_call.1} parent=1 // pred_fallthru
      _
    %v21 = vld [vmem:[#allocation2] sm:$0xff]
    %22 = vrot.lane.b32.xlu0 %v21, 1
    %v23 = vpop.permute.xlu0 %22
    %24 = vst [vmem:[#allocation5] sm:$0xff] %v23
    // Predicated region
    $region10: #{tpu_custom_call.1} parent=1 // pred_check
      _
    $region11: #{tpu_custom_call.1} parent=1 // pred_check_branch
      %26 = sbr.rel (0) target = $region13
    $region12: #{tpu_custom_call.1} parent=1 // pred_region
      %s28 = ssub.s32 128, 128
      %29 = vsyncadd [#allocation4], %s28
      %s31 = sshll.u32 [#allocation5], 4
      %s32 = int_to_ptr.vmem [resolvable:$true] %s31
      %34 = dma.vmem_to_hbm [thread:$0]  %s32, 128, %s1, [#allocation4]
    $region13: #{tpu_custom_call.1} parent=1 // pred_fallthru
      _
    // Predicated region
    $region14: #{tpu_custom_call.1} parent=1 // pred_check
      _
    $region15: #{tpu_custom_call.1} parent=1 // pred_check_branch
      %36 = sbr.rel (0) target = $region17
    $region16: #{tpu_custom_call.1} parent=1 // pred_region
      %37 = dma.done [#allocation4], 128
    $region17: #{tpu_custom_call.1} parent=1 // pred_fallthru
      _
    %38 = vsyncpa [#allocation3], 1
    %39 = vsyncpa [#allocation4], 1

</llo_original>
